<compile_context>
chip_gen: v5e
topology: v5e:2x2
jax: 0.10.0
libtpu: 0.0.40
codegen_flags: <defaults>
</compile_context>

<pallas_src>
import functools

import jax
import jax.numpy as jnp
from jax.experimental import pallas as pl
from jax.experimental.pallas import tpu as pltpu


# ---------------------------------------------------------------------------
# Fused kernel: encoder -> (rollout fused with decoderNet fc1) -> block-diag
# decoderNet fc2/fc3 on the wide tensor -> per-step output slabs.
# ---------------------------------------------------------------------------
def _koopman_kernel(steps, n_out,
                    x_ref,
                    ew1_ref, eb1_ref, ew2_ref, eb2_ref, ew3_ref, eb3_ref,
                    wroll_ref, broll_ref,
                    w2_ref, b2_ref, w3_ref, b3_ref,
                    out_ref):
    f32 = jnp.float32

    # ---- encoder: tanh(fc1) -> tanh(fc2) -> fc3 ----
    x = x_ref[...]
    h = jnp.tanh(jnp.dot(x, ew1_ref[...], preferred_element_type=f32)
                 + eb1_ref[...])
    h = jnp.tanh(jnp.dot(h, ew2_ref[...], preferred_element_type=f32)
                 + eb2_ref[...])
    z = jnp.dot(h, ew3_ref[...], preferred_element_type=f32) + eb3_ref[...]

    # ---- Koopman rollout fused with decoderNet fc1:
    # column block s of wroll is K^(s+1) @ dw1 (last block is dw1, i.e. the
    # decoder(z) branch), so u[:, s*H:(s+1)*H] == tanh(fc1(z @ K^(s+1))).
    u = jnp.tanh(jnp.dot(z, wroll_ref[...], preferred_element_type=f32)
                 + broll_ref[...])

    # ---- decoderNet fc2 / fc3 as block-diagonal matmuls over the wide tensor
    # (one MXU pass each; the off-diagonal zeros are free FLOPs).
    v = jnp.tanh(jnp.dot(u, w2_ref[...], preferred_element_type=f32)
                 + b2_ref[...])
    d = jnp.tanh(jnp.dot(v, w3_ref[...], preferred_element_type=f32)
                 + b3_ref[...])                       # (TB, (steps+1)*N)

    # ---- per-step output slabs (last dim == n_out, un-padded -> minimal HBM
    # writeback; the wrapper only reshapes, never slices/copies).
    for s in range(steps + 1):
        out_ref[s, :, :] = d[:, s * n_out:(s + 1) * n_out]


# ---------------------------------------------------------------------------
# Wrapper helpers
# ---------------------------------------------------------------------------
def _full_spec(arr):
    nd = arr.ndim
    return pl.BlockSpec(arr.shape, lambda i, nd=nd: (0,) * nd)


def _vmem_budget_bytes():
    """Per-chip-conservative VMEM target (~3/8 of capacity) with safe fallback."""
    try:
        cap = getattr(pltpu.get_tpu_info(), "vmem_capacity_bytes", None)
        if cap:
            return min(int(cap) * 3 // 8, 48 * 2 ** 20)
    except Exception:
        pass
    # Fits v7x's 64 MiB VMEM and every chip's default scoped limit comfortably.
    return 24 * 2 ** 20


def _pick_batch_tile(B, N, S, H, weight_bytes, budget_bytes):
    """VMEM-budget-derived batch tile (multiple of 8 dividing B) -> (TB, est)."""
    if B % 8 != 0:
        return B, None            # full-dim block fallback for ragged batch
    # bytes per batch row: double-buffered x block + double-buffered out block
    # + live wide intermediates (u, v, d).
    per_row = (2 * N + 2 * S * N + 2 * S * H + S * N) * 4
    avail = budget_bytes - 2 * weight_bytes
    tb = max(8, min(B, avail // per_row) // 8 * 8)
    # Keep grid >= 2 (v7x dual-TC sharding) and >= 4 for larger batches
    # (v6e/v5e DMA overlap), budget permitting.
    if B >= 32:
        tb = min(tb, max(8, (B // 4) // 8 * 8))
    elif B >= 16:
        tb = min(tb, max(8, (B // 2) // 8 * 8))
    while B % tb != 0:
        tb -= 8
    est = 2 * weight_bytes + per_row * tb
    return tb, est


def koopman_ae_forward(x, params, *, m, n, steps):
    """x: (B, 1, m, n) float32. Returns (steps+1, B, 1, m, n):
    decoderNet(z @ K^s) for s = 1..steps, then decoderNet(z) last."""
    B = x.shape[0]
    N = m * n
    S = steps + 1
    x_flat = x.reshape(B, N).astype(jnp.float32)

    (ew1, eb1, ew2, eb2, ew3, eb3, K, dw1, db1, dw2, db2, dw3, db3) = params
    H = dw1.shape[1]
    f32 = jnp.float32

    # --- wrapper-side weight fusion (review opt #1, option B) ---
    # rollout + decoderNet fc1:  [K^1 dw1 | K^2 dw1 | ... | K^steps dw1 | dw1]
    blocks, kp = [], K
    for _ in range(steps):
        blocks.append(kp @ dw1)
        kp = kp @ K
    blocks.append(dw1)                               # identity branch -> decoder(z)
    w_roll = jnp.concatenate(blocks, axis=1)         # (b, S*H)
    b_roll = jnp.tile(db1, (1, S))                   # (1, S*H)

    # block-diagonal decoderNet fc2 / fc3 (kron(I_S, W) == blockdiag(W,...,W))
    eye_s = jnp.eye(S, dtype=f32)
    w2_bd = jnp.kron(eye_s, dw2)                     # (S*H, S*H)
    b2_bd = jnp.tile(db2, (1, S))
    w3_bd = jnp.kron(eye_s, dw3)                     # (S*H, S*N)
    b3_bd = jnp.tile(db3, (1, S))

    weights = (ew1, eb1, ew2, eb2, ew3, eb3,
               w_roll, b_roll, w2_bd, b2_bd, w3_bd, b3_bd)
    weight_bytes = sum(int(a.size) * 4 for a in weights)

    TB, est = _pick_batch_tile(B, N, S, H, weight_bytes, _vmem_budget_bytes())
    grid = (B // TB,)

    vmem_limit = None
    if est is not None and est > 12 * 2 ** 20:
        vmem_limit = int(min(max(2 * est, 32 * 2 ** 20), 64 * 2 ** 20))

    in_specs = [pl.BlockSpec((TB, N), lambda i: (i, 0))] + [
        _full_spec(a) for a in weights
    ]
    out_spec = pl.BlockSpec((S, TB, N), lambda i: (0, i, 0))

    kernel = functools.partial(_koopman_kernel, steps, N)

    stacked = pl.pallas_call(
        kernel,
        out_shape=jax.ShapeDtypeStruct((S, B, N), jnp.float32),
        grid=grid,
        in_specs=in_specs,
        out_specs=out_spec,
        compiler_params=pltpu.CompilerParams(
            dimension_semantics=("parallel",),
            vmem_limit_bytes=vmem_limit),
    )(x_flat, *weights)

    # Contiguous reshape only (no slice / transpose / copy of the output slab).
    return stacked.reshape(S, B, 1, m, n)


# ---------------------------------------------------------------------------
# Deterministic parameter construction (mirrors the PyTorch __init__ shapes)
# ---------------------------------------------------------------------------
def _xavier_normal(key, fan_in, fan_out):
    std = (2.0 / (fan_in + fan_out)) ** 0.5
    return std * jax.random.normal(key, (fan_in, fan_out), jnp.float32)


def build_params(key, m, n, b, alpha=1, init_scale=1.0):
    N = m * n
    H = 16 * alpha
    keys = jax.random.split(key, 8)

    ew1 = _xavier_normal(keys[0], N, H)
    eb1 = jnp.zeros((1, H), jnp.float32)
    ew2 = _xavier_normal(keys[1], H, H)
    eb2 = jnp.zeros((1, H), jnp.float32)
    ew3 = _xavier_normal(keys[2], H, b)
    eb3 = jnp.zeros((1, b), jnp.float32)

    omega = (1.0 / b) * jax.random.normal(keys[3], (b, b), jnp.float32)
    U, _, Vt = jnp.linalg.svd(omega)
    W_dyn = (U @ Vt) * init_scale          # torch Linear weight (out, in)
    K = W_dyn.T                            # kernel uses q @ K == q @ W_dyn.T

    dw1 = _xavier_normal(keys[4], b, H)
    db1 = jnp.zeros((1, H), jnp.float32)
    dw2 = _xavier_normal(keys[5], H, H)
    db2 = jnp.zeros((1, H), jnp.float32)
    dw3 = _xavier_normal(keys[6], H, N)
    db3 = jnp.zeros((1, N), jnp.float32)

    return (ew1, eb1, ew2, eb2, ew3, eb3, K, dw1, db1, dw2, db2, dw3, db3)


# ---------------------------------------------------------------------------
# Pure-JAX reference (original serial semantics) for correctness check
# ---------------------------------------------------------------------------
def reference_forward(x, params, *, m, n, steps):
    (ew1, eb1, ew2, eb2, ew3, eb3, K, dw1, db1, dw2, db2, dw3, db3) = params
    B = x.shape[0]
    xf = x.reshape(B, m * n)
    h = jnp.tanh(xf @ ew1 + eb1)
    h = jnp.tanh(h @ ew2 + eb2)
    z = h @ ew3 + eb3

    def dec(q):   # decoderNet: tanh(fc1) -> tanh(fc2) -> tanh(fc3)
        d = jnp.tanh(q @ dw1 + db1)
        d = jnp.tanh(d @ dw2 + db2)
        d = jnp.tanh(d @ dw3 + db3)
        return d.reshape(B, 1, m, n)

    out = []
    q = z
    for _ in range(steps):
        q = q @ K
        out.append(dec(q))
    out.append(dec(z))
    return out


if __name__ == "__main__":
    m, n, b = 8, 8, 8
    alpha = 1
    steps = 3
    batch = 16          # -> TB = 8, grid = (2,): exercises tiling + megacore

    key = jax.random.PRNGKey(0)
    k_x, k_p = jax.random.split(key)
    x = jax.random.normal(k_x, (batch, 1, m, n), jnp.float32)
    params = build_params(k_p, m, n, b, alpha=alpha, init_scale=1.0)

    out = koopman_ae_forward(x, params, m=m, n=n, steps=steps)
    out = jax.block_until_ready(out)

    refs = jnp.stack(reference_forward(x, params, m=m, n=n, steps=steps))
    assert out.shape == (steps + 1, batch, 1, m, n), out.shape
    err = float(jnp.max(jnp.abs(out - refs)))
    assert err < 1e-4, f"max abs error {err}"

    print("KERNEL_OK")
</pallas_src>

<mosaic_0001>
module attributes {stable_mosaic.version = 11 : i64} {
  func.func @_koopman_kernel(%arg0: i32, %arg1: memref<8x64xf32, #tpu.memory_space<vmem>>, %arg2: memref<64x16xf32, #tpu.memory_space<vmem>>, %arg3: memref<1x16xf32, #tpu.memory_space<vmem>>, %arg4: memref<16x16xf32, #tpu.memory_space<vmem>>, %arg5: memref<1x16xf32, #tpu.memory_space<vmem>>, %arg6: memref<16x8xf32, #tpu.memory_space<vmem>>, %arg7: memref<1x8xf32, #tpu.memory_space<vmem>>, %arg8: memref<8x64xf32, #tpu.memory_space<vmem>>, %arg9: memref<1x64xf32, #tpu.memory_space<vmem>>, %arg10: memref<64x64xf32, #tpu.memory_space<vmem>>, %arg11: memref<1x64xf32, #tpu.memory_space<vmem>>, %arg12: memref<64x256xf32, #tpu.memory_space<vmem>>, %arg13: memref<1x256xf32, #tpu.memory_space<vmem>>, %arg14: memref<4x8x64xf32, #tpu.memory_space<vmem>>) attributes {dimension_semantics = [#tpu.dimension_semantics<parallel>], iteration_bounds = array<i64: 2>, scalar_prefetch = 0 : i64, scratch_operands = 0 : i64, tpu.core_type = #tpu.core_type<tc>, window_params = [{transform_indices = @transform_0, window_bounds = array<i64: 8, 64>}, {pipeline_mode = #tpu.pipeline_mode<synchronous>, transform_indices = @transform_1, window_bounds = array<i64: 64, 16>}, {pipeline_mode = #tpu.pipeline_mode<synchronous>, transform_indices = @transform_2, window_bounds = array<i64: 1, 16>}, {pipeline_mode = #tpu.pipeline_mode<synchronous>, transform_indices = @transform_3, window_bounds = array<i64: 16, 16>}, {pipeline_mode = #tpu.pipeline_mode<synchronous>, transform_indices = @transform_4, window_bounds = array<i64: 1, 16>}, {pipeline_mode = #tpu.pipeline_mode<synchronous>, transform_indices = @transform_5, window_bounds = array<i64: 16, 8>}, {pipeline_mode = #tpu.pipeline_mode<synchronous>, transform_indices = @transform_6, window_bounds = array<i64: 1, 8>}, {pipeline_mode = #tpu.pipeline_mode<synchronous>, transform_indices = @transform_7, window_bounds = array<i64: 8, 64>}, {pipeline_mode = #tpu.pipeline_mode<synchronous>, transform_indices = @transform_8, window_bounds = array<i64: 1, 64>}, {pipeline_mode = #tpu.pipeline_mode<synchronous>, transform_indices = @transform_9, window_bounds = array<i64: 64, 64>}, {pipeline_mode = #tpu.pipeline_mode<synchronous>, transform_indices = @transform_10, window_bounds = array<i64: 1, 64>}, {pipeline_mode = #tpu.pipeline_mode<synchronous>, transform_indices = @transform_11, window_bounds = array<i64: 64, 256>}, {pipeline_mode = #tpu.pipeline_mode<synchronous>, transform_indices = @transform_12, window_bounds = array<i64: 1, 256>}, {transform_indices = @transform_13, window_bounds = array<i64: 4, 8, 64>}]} {
    %c0 = arith.constant 0 : index
    %c0_0 = arith.constant 0 : index
    %0 = vector.load %arg1[%c0, %c0_0] : memref<8x64xf32, #tpu.memory_space<vmem>>, vector<8x64xf32>
    %c0_1 = arith.constant 0 : index
    %c0_2 = arith.constant 0 : index
    %1 = vector.load %arg2[%c0_1, %c0_2] : memref<64x16xf32, #tpu.memory_space<vmem>>, vector<64x16xf32>
    %cst = arith.constant dense<0.000000e+00> : vector<8x16xf32>
    %2 = tpu.matmul %0, %1, %cst {dimension_numbers = #tpu.dot_dimension_numbers<[1], [0], [0], [1], [0, 0, 1, 1], [], []>} : vector<8x64xf32>, vector<64x16xf32>, vector<8x16xf32> -> vector<8x16xf32>
    %c0_3 = arith.constant 0 : index
    %c0_4 = arith.constant 0 : index
    %3 = vector.load %arg3[%c0_3, %c0_4] : memref<1x16xf32, #tpu.memory_space<vmem>>, vector<1x16xf32>
    %4 = vector.broadcast %3 : vector<1x16xf32> to vector<8x16xf32>
    %5 = arith.addf %2, %4 : vector<8x16xf32>
    %6 = math.tanh %5 : vector<8x16xf32>
    %c0_5 = arith.constant 0 : index
    %c0_6 = arith.constant 0 : index
    %7 = vector.load %arg4[%c0_5, %c0_6] : memref<16x16xf32, #tpu.memory_space<vmem>>, vector<16x16xf32>
    %cst_7 = arith.constant dense<0.000000e+00> : vector<8x16xf32>
    %8 = tpu.matmul %6, %7, %cst_7 {dimension_numbers = #tpu.dot_dimension_numbers<[1], [0], [0], [1], [0, 0, 1, 1], [], []>} : vector<8x16xf32>, vector<16x16xf32>, vector<8x16xf32> -> vector<8x16xf32>
    %c0_8 = arith.constant 0 : index
    %c0_9 = arith.constant 0 : index
    %9 = vector.load %arg5[%c0_8, %c0_9] : memref<1x16xf32, #tpu.memory_space<vmem>>, vector<1x16xf32>
    %10 = vector.broadcast %9 : vector<1x16xf32> to vector<8x16xf32>
    %11 = arith.addf %8, %10 : vector<8x16xf32>
    %12 = math.tanh %11 : vector<8x16xf32>
    %c0_10 = arith.constant 0 : index
    %c0_11 = arith.constant 0 : index
    %13 = vector.load %arg6[%c0_10, %c0_11] : memref<16x8xf32, #tpu.memory_space<vmem>>, vector<16x8xf32>
    %cst_12 = arith.constant dense<0.000000e+00> : vector<8x8xf32>
    %14 = tpu.matmul %12, %13, %cst_12 {dimension_numbers = #tpu.dot_dimension_numbers<[1], [0], [0], [1], [0, 0, 1, 1], [], []>} : vector<8x16xf32>, vector<16x8xf32>, vector<8x8xf32> -> vector<8x8xf32>
    %c0_13 = arith.constant 0 : index
    %c0_14 = arith.constant 0 : index
    %15 = vector.load %arg7[%c0_13, %c0_14] : memref<1x8xf32, #tpu.memory_space<vmem>>, vector<1x8xf32>
    %16 = vector.broadcast %15 : vector<1x8xf32> to vector<8x8xf32>
    %17 = arith.addf %14, %16 : vector<8x8xf32>
    %c0_15 = arith.constant 0 : index
    %c0_16 = arith.constant 0 : index
    %18 = vector.load %arg8[%c0_15, %c0_16] : memref<8x64xf32, #tpu.memory_space<vmem>>, vector<8x64xf32>
    %cst_17 = arith.constant dense<0.000000e+00> : vector<8x64xf32>
    %19 = tpu.matmul %17, %18, %cst_17 {dimension_numbers = #tpu.dot_dimension_numbers<[1], [0], [0], [1], [0, 0, 1, 1], [], []>} : vector<8x8xf32>, vector<8x64xf32>, vector<8x64xf32> -> vector<8x64xf32>
    %c0_18 = arith.constant 0 : index
    %c0_19 = arith.constant 0 : index
    %20 = vector.load %arg9[%c0_18, %c0_19] : memref<1x64xf32, #tpu.memory_space<vmem>>, vector<1x64xf32>
    %21 = vector.broadcast %20 : vector<1x64xf32> to vector<8x64xf32>
    %22 = arith.addf %19, %21 : vector<8x64xf32>
    %23 = math.tanh %22 : vector<8x64xf32>
    %c0_20 = arith.constant 0 : index
    %c0_21 = arith.constant 0 : index
    %24 = vector.load %arg10[%c0_20, %c0_21] : memref<64x64xf32, #tpu.memory_space<vmem>>, vector<64x64xf32>
    %cst_22 = arith.constant dense<0.000000e+00> : vector<8x64xf32>
    %25 = tpu.matmul %23, %24, %cst_22 {dimension_numbers = #tpu.dot_dimension_numbers<[1], [0], [0], [1], [0, 0, 1, 1], [], []>} : vector<8x64xf32>, vector<64x64xf32>, vector<8x64xf32> -> vector<8x64xf32>
    %c0_23 = arith.constant 0 : index
    %c0_24 = arith.constant 0 : index
    %26 = vector.load %arg11[%c0_23, %c0_24] : memref<1x64xf32, #tpu.memory_space<vmem>>, vector<1x64xf32>
    %27 = vector.broadcast %26 : vector<1x64xf32> to vector<8x64xf32>
    %28 = arith.addf %25, %27 : vector<8x64xf32>
    %29 = math.tanh %28 : vector<8x64xf32>
    %c0_25 = arith.constant 0 : index
    %c0_26 = arith.constant 0 : index
    %30 = vector.load %arg12[%c0_25, %c0_26] : memref<64x256xf32, #tpu.memory_space<vmem>>, vector<64x256xf32>
    %cst_27 = arith.constant dense<0.000000e+00> : vector<8x256xf32>
    %31 = tpu.matmul %29, %30, %cst_27 {dimension_numbers = #tpu.dot_dimension_numbers<[1], [0], [0], [1], [0, 0, 1, 1], [], []>} : vector<8x64xf32>, vector<64x256xf32>, vector<8x256xf32> -> vector<8x256xf32>
    %c0_28 = arith.constant 0 : index
    %c0_29 = arith.constant 0 : index
    %32 = vector.load %arg13[%c0_28, %c0_29] : memref<1x256xf32, #tpu.memory_space<vmem>>, vector<1x256xf32>
    %33 = vector.broadcast %32 : vector<1x256xf32> to vector<8x256xf32>
    %34 = arith.addf %31, %33 : vector<8x256xf32>
    %35 = math.tanh %34 : vector<8x256xf32>
    %36 = vector.extract_strided_slice %35 {offsets = [0, 0], sizes = [8, 64], strides = [1, 1]} : vector<8x256xf32> to vector<8x64xf32>
    %c0_30 = arith.constant 0 : index
    %c0_31 = arith.constant 0 : index
    %c0_32 = arith.constant 0 : index
    %37 = vector.load %arg14[%c0_30, %c0_31, %c0_32] : memref<4x8x64xf32, #tpu.memory_space<vmem>>, vector<1x8x64xf32>
    %38 = vector.shape_cast %37 : vector<1x8x64xf32> to vector<8x64xf32>
    %39 = vector.shape_cast %36 : vector<8x64xf32> to vector<1x8x64xf32>
    tpu.vector_store %arg14[%c0_30, %c0_31, %c0_32], %39 {strides = array<i32>} : memref<4x8x64xf32, #tpu.memory_space<vmem>>, vector<1x8x64xf32>,
    %40 = vector.extract_strided_slice %35 {offsets = [0, 64], sizes = [8, 64], strides = [1, 1]} : vector<8x256xf32> to vector<8x64xf32>
    %c1 = arith.constant 1 : index
    %c0_33 = arith.constant 0 : index
    %c0_34 = arith.constant 0 : index
    %41 = vector.load %arg14[%c1, %c0_33, %c0_34] : memref<4x8x64xf32, #tpu.memory_space<vmem>>, vector<1x8x64xf32>
    %42 = vector.shape_cast %41 : vector<1x8x64xf32> to vector<8x64xf32>
    %43 = vector.shape_cast %40 : vector<8x64xf32> to vector<1x8x64xf32>
    tpu.vector_store %arg14[%c1, %c0_33, %c0_34], %43 {strides = array<i32>} : memref<4x8x64xf32, #tpu.memory_space<vmem>>, vector<1x8x64xf32>,
    %44 = vector.extract_strided_slice %35 {offsets = [0, 128], sizes = [8, 64], strides = [1, 1]} : vector<8x256xf32> to vector<8x64xf32>
    %c2 = arith.constant 2 : index
    %c0_35 = arith.constant 0 : index
    %c0_36 = arith.constant 0 : index
    %45 = vector.load %arg14[%c2, %c0_35, %c0_36] : memref<4x8x64xf32, #tpu.memory_space<vmem>>, vector<1x8x64xf32>
    %46 = vector.shape_cast %45 : vector<1x8x64xf32> to vector<8x64xf32>
    %47 = vector.shape_cast %44 : vector<8x64xf32> to vector<1x8x64xf32>
    tpu.vector_store %arg14[%c2, %c0_35, %c0_36], %47 {strides = array<i32>} : memref<4x8x64xf32, #tpu.memory_space<vmem>>, vector<1x8x64xf32>,
    %48 = vector.extract_strided_slice %35 {offsets = [0, 192], sizes = [8, 64], strides = [1, 1]} : vector<8x256xf32> to vector<8x64xf32>
    %c3 = arith.constant 3 : index
    %c0_37 = arith.constant 0 : index
    %c0_38 = arith.constant 0 : index
    %49 = vector.load %arg14[%c3, %c0_37, %c0_38] : memref<4x8x64xf32, #tpu.memory_space<vmem>>, vector<1x8x64xf32>
    %50 = vector.shape_cast %49 : vector<1x8x64xf32> to vector<8x64xf32>
    %51 = vector.shape_cast %48 : vector<8x64xf32> to vector<1x8x64xf32>
    tpu.vector_store %arg14[%c3, %c0_37, %c0_38], %51 {strides = array<i32>} : memref<4x8x64xf32, #tpu.memory_space<vmem>>, vector<1x8x64xf32>,
    return
  }
  func.func @transform_0(%arg0: i32) -> (i32, i32) {
    %c0_i32 = arith.constant 0 : i32
    %c0_i32_0 = arith.constant 0 : i32
    return %arg0, %c0_i32 : i32, i32
  }
  func.func @transform_1(%arg0: i32) -> (i32, i32) {
    %c0_i32 = arith.constant 0 : i32
    %c0_i32_0 = arith.constant 0 : i32
    %c0_i32_1 = arith.constant 0 : i32
    return %c0_i32, %c0_i32_0 : i32, i32
  }
  func.func @transform_2(%arg0: i32) -> (i32, i32) {
    %c0_i32 = arith.constant 0 : i32
    %c0_i32_0 = arith.constant 0 : i32
    %c0_i32_1 = arith.constant 0 : i32
    return %c0_i32, %c0_i32_0 : i32, i32
  }
  func.func @transform_3(%arg0: i32) -> (i32, i32) {
    %c0_i32 = arith.constant 0 : i32
    %c0_i32_0 = arith.constant 0 : i32
    %c0_i32_1 = arith.constant 0 : i32
    return %c0_i32, %c0_i32_0 : i32, i32
  }
  func.func @transform_4(%arg0: i32) -> (i32, i32) {
    %c0_i32 = arith.constant 0 : i32
    %c0_i32_0 = arith.constant 0 : i32
    %c0_i32_1 = arith.constant 0 : i32
    return %c0_i32, %c0_i32_0 : i32, i32
  }
  func.func @transform_5(%arg0: i32) -> (i32, i32) {
    %c0_i32 = arith.constant 0 : i32
    %c0_i32_0 = arith.constant 0 : i32
    %c0_i32_1 = arith.constant 0 : i32
    return %c0_i32, %c0_i32_0 : i32, i32
  }
  func.func @transform_6(%arg0: i32) -> (i32, i32) {
    %c0_i32 = arith.constant 0 : i32
    %c0_i32_0 = arith.constant 0 : i32
    %c0_i32_1 = arith.constant 0 : i32
    return %c0_i32, %c0_i32_0 : i32, i32
  }
  func.func @transform_7(%arg0: i32) -> (i32, i32) {
    %c0_i32 = arith.constant 0 : i32
    %c0_i32_0 = arith.constant 0 : i32
    %c0_i32_1 = arith.constant 0 : i32
    return %c0_i32, %c0_i32_0 : i32, i32
  }
  func.func @transform_8(%arg0: i32) -> (i32, i32) {
    %c0_i32 = arith.constant 0 : i32
    %c0_i32_0 = arith.constant 0 : i32
    %c0_i32_1 = arith.constant 0 : i32
    return %c0_i32, %c0_i32_0 : i32, i32
  }
  func.func @transform_9(%arg0: i32) -> (i32, i32) {
    %c0_i32 = arith.constant 0 : i32
    %c0_i32_0 = arith.constant 0 : i32
    %c0_i32_1 = arith.constant 0 : i32
    return %c0_i32, %c0_i32_0 : i32, i32
  }
  func.func @transform_10(%arg0: i32) -> (i32, i32) {
    %c0_i32 = arith.constant 0 : i32
    %c0_i32_0 = arith.constant 0 : i32
    %c0_i32_1 = arith.constant 0 : i32
    return %c0_i32, %c0_i32_0 : i32, i32
  }
  func.func @transform_11(%arg0: i32) -> (i32, i32) {
    %c0_i32 = arith.constant 0 : i32
    %c0_i32_0 = arith.constant 0 : i32
    %c0_i32_1 = arith.constant 0 : i32
    return %c0_i32, %c0_i32_0 : i32, i32
  }
  func.func @transform_12(%arg0: i32) -> (i32, i32) {
    %c0_i32 = arith.constant 0 : i32
    %c0_i32_0 = arith.constant 0 : i32
    %c0_i32_1 = arith.constant 0 : i32
    return %c0_i32, %c0_i32_0 : i32, i32
  }
  func.func @transform_13(%arg0: i32) -> (i32, i32, i32) {
    %c0_i32 = arith.constant 0 : i32
    %c0_i32_0 = arith.constant 0 : i32
    %c0_i32_1 = arith.constant 0 : i32
    return %c0_i32, %arg0, %c0_i32_0 : i32, i32, i32
  }
}

</mosaic_0001>

<llo_original>
// kernel: tpu_custom_call.1
$region0: #{tpu_custom_call.1}
  #allocation0 [shape = 'u32[]', space=smem, size = 0x4, offset = 0x4, fixed_abs, tag = 'smem constant byte address 0x4 - core index']
  #allocation1 [shape = 'u32[72,128]{1,0:T(1,128)}', space=vmem, size = 0x9000, scoped, tag = 'internal scratch']
  %s0 = inlined_call_operand.vmem [shape: f32[16,64], index: 0, kind: input, shape index: {}]
  %s1 = inlined_call_operand.vmem [shape: f32[64,16], index: 1, kind: input, shape index: {}]
  %s2 = inlined_call_operand.vmem [shape: f32[1,16], index: 2, kind: input, shape index: {}]
  %s3 = inlined_call_operand.hbm [shape: f32[16,16], index: 3, kind: input, shape index: {}]
  %s4 = inlined_call_operand.hbm [shape: f32[1,16], index: 4, kind: input, shape index: {}]
  %s5 = inlined_call_operand.vmem [shape: f32[16,8], index: 5, kind: input, shape index: {}]
  %s6 = inlined_call_operand.vmem [shape: f32[1,8], index: 6, kind: input, shape index: {}]
  %s7 = inlined_call_operand.vmem [shape: f32[8,64], index: 7, kind: input, shape index: {}]
  %s8 = inlined_call_operand.vmem [shape: f32[1,64], index: 8, kind: input, shape index: {}]
  %s9 = inlined_call_operand.vmem [shape: f32[64,64], index: 9, kind: input, shape index: {}]
  %s10 = inlined_call_operand.vmem [shape: f32[1,64], index: 10, kind: input, shape index: {}]
  %s11 = inlined_call_operand.hbm [shape: f32[64,256], index: 11, kind: input, shape index: {}]
  %s12 = inlined_call_operand.vmem [shape: f32[1,256], index: 12, kind: input, shape index: {}]
  %s13 = inlined_call_operand.hbm [shape: f32[4,16,64], index: 13, kind: output, shape index: {}]
  %s14 = sld [smem:[#allocation0]]
  $region97: #{tpu_custom_call.1} parent=0
    _
  %s16 = ssub.s32 1, %s14
  %s17 = scalar_select 0, %s16, %s14
  $region1: #{tpu_custom_call.1} parent=0
    #allocation2 [shape = 'u8[8192]{0}', space=vmem, size = 0x2000, scoped, tag = 'input window, operand 3, single buffered']
    #allocation3 [shape = 's32[2]{0}', space=sflag, size = 0x8, scoped, tag = 'scoped memory for tpu_custom_call.1']
    #allocation4 [shape = 's32[2]{0}', space=sflag, size = 0x8, scoped, tag = 'scoped memory for tpu_custom_call.1']
    #allocation5 [shape = 'u8[512]{0}', space=vmem, size = 0x400, scoped, tag = 'input window, operand 4, single buffered']
    #allocation6 [shape = 's32[1]{0}', space=sflag, size = 0x4, scoped, tag = 'scoped memory for tpu_custom_call.1']
    #allocation7 [shape = 'u8[65536]{0}', space=vmem, size = 0x10000, scoped, tag = 'input window, operand 11, single buffered']
    #allocation8 [shape = 'u8[32768]{0}', space=vmem, size = 0x8000, scoped, tag = 'output window, operand 0']
    %18 = vsyncpa [#allocation3], 0
    %19 = vsyncpa [#allocation6], 0
    %20 = vsyncpa [#allocation4], 0
    %s21 = scalar_lea.sflag [#allocation4], 1
    %22 = vsyncpa %s21, 0
    loop: start=0, step=1, limit=4
    $region2: #{tpu_custom_call.1} parent=1 // loop_pre_header
      _
    $region3: #{tpu_custom_call.1} parent=1 // loop_header
      %s24 = sphi 0, %s28
      %p25 = scmp.ge.s32.totalorder %s24, 4
      %s34 = sphi 0, %s36
      %s37 = sphi 0, %s34
      %s38 = sphi 0, %s37
      %s54 = sphi 0, %s38
      %s58 = sphi 0, %s58
      %s60 = sphi 0, %s58
      %s61 = sphi 0, %s60
      %s75 = sphi 0, %s61
      %s79 = sphi 0, %s79
      %s81 = sphi 0, %s79
      %s82 = sphi 0, %s81
      %s96 = sphi 0, %s82
      %s100 = sphi 0, %s100
      %s102 = sphi 0, %s100
      %s103 = sphi 0, %s102
      %s117 = sphi 0, %s103
      %s121 = sphi 0, %s121
      %s123 = sphi 0, %s121
      %s124 = sphi 0, %s123
      %s138 = sphi 0, %s124
      %s142 = sphi 0, %s142
      %s144 = sphi 0, %s142
      %s145 = sphi 0, %s144
      %s159 = sphi 0, %s145
      %s163 = sphi 0, %s163
      %s165 = sphi 0, %s163
      %s166 = sphi 0, %s165
      %s180 = sphi 0, %s166
      %s184 = sphi 0, %s184
      %s186 = sphi 0, %s184
      %s187 = sphi 0, %s186
      %s201 = sphi 0, %s187
      %s205 = sphi 0, %s205
      %s207 = sphi 0, %s205
      %s208 = sphi 0, %s207
      %s222 = sphi 0, %s208
      %s226 = sphi 0, %s226
      %s228 = sphi 0, %s226
      %s229 = sphi 0, %s228
      %s243 = sphi 0, %s229
      %s247 = sphi 0, %s247
      %s249 = sphi 0, %s247
      %s250 = sphi 0, %s249
      %s264 = sphi 0, %s250
      %s268 = sphi 0, %s268
      %s270 = sphi 0, %s268
      %s271 = sphi 0, %s270
      %s285 = sphi 0, %s271
      %s289 = sphi 0, %s289
      %s291 = sphi 0, %s289
      %s292 = sphi 0, %s291
      %s306 = sphi 0, %s292
      %s312 = sphi 0, %s314
      %s315 = sphi 0, %s312
      %s316 = sphi 0, %s315
      %s332 = sphi 0, %s316
    $region4: #{tpu_custom_call.1} parent=1 // loop_header_branch
      %27 = sbr.rel (%p25) target = $region8
    $region5: #{tpu_custom_call.1} parent=1 // loop_body
      %s29 = ssub.s32 %s24, 1
      %s30 = ssub.s32 %s24, 2
      %s31 = sadd.s32 %s24, 1
      %s32 = ssub.s32 %s24, %s31
      %p33 = scmp.eq.s32.totalorder %s32, 0
      %s35 = sadd.s32 %s34, 1
      %s36 = scalar_select %p33, %s34, %s35
      %p39 = pneg %p33
      %p40 = scmp.eq.s32.totalorder %s24, 1
      %p41 = por %p39, %p40
      %p42 = scmp.ne.s32.totalorder %s34, %s37
      %p43 = scmp.eq.s32.totalorder %s24, 0
      %p44 = por %p42, %p43
      %p45 = scmp.ne.s32.totalorder %s34, %s37
      %p46 = scmp.eq.s32.totalorder %s29, 1
      %p47 = por %p45, %p46
      %p48 = scmp.ne.s32.totalorder %s37, %s38
      %p49 = scmp.eq.s32.totalorder %s29, 0
      %p50 = por %p48, %p49
      %p51 = scmp.ne.s32.totalorder %s37, %s38
      %p52 = scmp.eq.s32.totalorder %s30, 1
      %p53 = por %p51, %p52
      %p55 = scmp.ne.s32.totalorder %s38, %s54
      %p56 = scmp.eq.s32.totalorder %s30, 0
      %p57 = por %p55, %p56
      %s59 = sadd.s32 %s58, 1
      %p62 = scmp.eq.s32.totalorder %s24, 1
      %p63 = scmp.ne.s32.totalorder %s58, %s60
      %p64 = scmp.eq.s32.totalorder %s24, 0
      %p65 = por %p63, %p64
      %p66 = scmp.ne.s32.totalorder %s58, %s60
      %p67 = scmp.eq.s32.totalorder %s29, 1
      %p68 = por %p66, %p67
      %p69 = scmp.ne.s32.totalorder %s60, %s61
      %p70 = scmp.eq.s32.totalorder %s29, 0
      %p71 = por %p69, %p70
      %p72 = scmp.ne.s32.totalorder %s60, %s61
      %p73 = scmp.eq.s32.totalorder %s30, 1
      %p74 = por %p72, %p73
      %p76 = scmp.ne.s32.totalorder %s61, %s75
      %p77 = scmp.eq.s32.totalorder %s30, 0
      %p78 = por %p76, %p77
      %s80 = sadd.s32 %s79, 1
      %p83 = scmp.eq.s32.totalorder %s24, 1
      %p84 = scmp.ne.s32.totalorder %s79, %s81
      %p85 = scmp.eq.s32.totalorder %s24, 0
      %p86 = por %p84, %p85
      %p87 = scmp.ne.s32.totalorder %s79, %s81
      %p88 = scmp.eq.s32.totalorder %s29, 1
      %p89 = por %p87, %p88
      %p90 = scmp.ne.s32.totalorder %s81, %s82
      %p91 = scmp.eq.s32.totalorder %s29, 0
      %p92 = por %p90, %p91
      %p93 = scmp.ne.s32.totalorder %s81, %s82
      %p94 = scmp.eq.s32.totalorder %s30, 1
      %p95 = por %p93, %p94
      %p97 = scmp.ne.s32.totalorder %s82, %s96
      %p98 = scmp.eq.s32.totalorder %s30, 0
      %p99 = por %p97, %p98
      %s101 = sadd.s32 %s100, 1
      %p104 = scmp.eq.s32.totalorder %s24, 1
      %p105 = scmp.ne.s32.totalorder %s100, %s102
      %p106 = scmp.eq.s32.totalorder %s24, 0
      %p107 = por %p105, %p106
      %p108 = scmp.ne.s32.totalorder %s100, %s102
      %p109 = scmp.eq.s32.totalorder %s29, 1
      %p110 = por %p108, %p109
      %p111 = scmp.ne.s32.totalorder %s102, %s103
      %p112 = scmp.eq.s32.totalorder %s29, 0
      %p113 = por %p111, %p112
      %p114 = scmp.ne.s32.totalorder %s102, %s103
      %p115 = scmp.eq.s32.totalorder %s30, 1
      %p116 = por %p114, %p115
      %p118 = scmp.ne.s32.totalorder %s103, %s117
      %p119 = scmp.eq.s32.totalorder %s30, 0
      %p120 = por %p118, %p119
      %s122 = sadd.s32 %s121, 1
      %p125 = scmp.eq.s32.totalorder %s24, 1
      %p126 = scmp.ne.s32.totalorder %s121, %s123
      %p127 = scmp.eq.s32.totalorder %s24, 0
      %p128 = por %p126, %p127
      %p129 = scmp.ne.s32.totalorder %s121, %s123
      %p130 = scmp.eq.s32.totalorder %s29, 1
      %p131 = por %p129, %p130
      %p132 = scmp.ne.s32.totalorder %s123, %s124
      %p133 = scmp.eq.s32.totalorder %s29, 0
      %p134 = por %p132, %p133
      %p135 = scmp.ne.s32.totalorder %s123, %s124
      %p136 = scmp.eq.s32.totalorder %s30, 1
      %p137 = por %p135, %p136
      %p139 = scmp.ne.s32.totalorder %s124, %s138
      %p140 = scmp.eq.s32.totalorder %s30, 0
      %p141 = por %p139, %p140
      %s143 = sadd.s32 %s142, 1
      %p146 = scmp.eq.s32.totalorder %s24, 1
      %p147 = scmp.ne.s32.totalorder %s142, %s144
      %p148 = scmp.eq.s32.totalorder %s24, 0
      %p149 = por %p147, %p148
      %p150 = scmp.ne.s32.totalorder %s142, %s144
      %p151 = scmp.eq.s32.totalorder %s29, 1
      %p152 = por %p150, %p151
      %p153 = scmp.ne.s32.totalorder %s144, %s145
      %p154 = scmp.eq.s32.totalorder %s29, 0
      %p155 = por %p153, %p154
      %p156 = scmp.ne.s32.totalorder %s144, %s145
      %p157 = scmp.eq.s32.totalorder %s30, 1
      %p158 = por %p156, %p157
      %p160 = scmp.ne.s32.totalorder %s145, %s159
      %p161 = scmp.eq.s32.totalorder %s30, 0
      %p162 = por %p160, %p161
      %s164 = sadd.s32 %s163, 1
      %p167 = scmp.eq.s32.totalorder %s24, 1
      %p168 = scmp.ne.s32.totalorder %s163, %s165
      %p169 = scmp.eq.s32.totalorder %s24, 0
      %p170 = por %p168, %p169
      %p171 = scmp.ne.s32.totalorder %s163, %s165
      %p172 = scmp.eq.s32.totalorder %s29, 1
      %p173 = por %p171, %p172
      %p174 = scmp.ne.s32.totalorder %s165, %s166
      %p175 = scmp.eq.s32.totalorder %s29, 0
      %p176 = por %p174, %p175
      %p177 = scmp.ne.s32.totalorder %s165, %s166
      %p178 = scmp.eq.s32.totalorder %s30, 1
      %p179 = por %p177, %p178
      %p181 = scmp.ne.s32.totalorder %s166, %s180
      %p182 = scmp.eq.s32.totalorder %s30, 0
      %p183 = por %p181, %p182
      %s185 = sadd.s32 %s184, 1
      %p188 = scmp.eq.s32.totalorder %s24, 1
      %p189 = scmp.ne.s32.totalorder %s184, %s186
      %p190 = scmp.eq.s32.totalorder %s24, 0
      %p191 = por %p189, %p190
      %p192 = scmp.ne.s32.totalorder %s184, %s186
      %p193 = scmp.eq.s32.totalorder %s29, 1
      %p194 = por %p192, %p193
      %p195 = scmp.ne.s32.totalorder %s186, %s187
      %p196 = scmp.eq.s32.totalorder %s29, 0
      %p197 = por %p195, %p196
      %p198 = scmp.ne.s32.totalorder %s186, %s187
      %p199 = scmp.eq.s32.totalorder %s30, 1
      %p200 = por %p198, %p199
      %p202 = scmp.ne.s32.totalorder %s187, %s201
      %p203 = scmp.eq.s32.totalorder %s30, 0
      %p204 = por %p202, %p203
      %s206 = sadd.s32 %s205, 1
      %p209 = scmp.eq.s32.totalorder %s24, 1
      %p210 = scmp.ne.s32.totalorder %s205, %s207
      %p211 = scmp.eq.s32.totalorder %s24, 0
      %p212 = por %p210, %p211
      %p213 = scmp.ne.s32.totalorder %s205, %s207
      %p214 = scmp.eq.s32.totalorder %s29, 1
      %p215 = por %p213, %p214
      %p216 = scmp.ne.s32.totalorder %s207, %s208
      %p217 = scmp.eq.s32.totalorder %s29, 0
      %p218 = por %p216, %p217
      %p219 = scmp.ne.s32.totalorder %s207, %s208
      %p220 = scmp.eq.s32.totalorder %s30, 1
      %p221 = por %p219, %p220
      %p223 = scmp.ne.s32.totalorder %s208, %s222
      %p224 = scmp.eq.s32.totalorder %s30, 0
      %p225 = por %p223, %p224
      %s227 = sadd.s32 %s226, 1
      %p230 = scmp.eq.s32.totalorder %s24, 1
      %p231 = scmp.ne.s32.totalorder %s226, %s228
      %p232 = scmp.eq.s32.totalorder %s24, 0
      %p233 = por %p231, %p232
      %p234 = scmp.ne.s32.totalorder %s226, %s228
      %p235 = scmp.eq.s32.totalorder %s29, 1
      %p236 = por %p234, %p235
      %p237 = scmp.ne.s32.totalorder %s228, %s229
      %p238 = scmp.eq.s32.totalorder %s29, 0
      %p239 = por %p237, %p238
      %p240 = scmp.ne.s32.totalorder %s228, %s229
      %p241 = scmp.eq.s32.totalorder %s30, 1
      %p242 = por %p240, %p241
      %p244 = scmp.ne.s32.totalorder %s229, %s243
      %p245 = scmp.eq.s32.totalorder %s30, 0
      %p246 = por %p244, %p245
      %s248 = sadd.s32 %s247, 1
      %p251 = scmp.eq.s32.totalorder %s24, 1
      %p252 = scmp.ne.s32.totalorder %s247, %s249
      %p253 = scmp.eq.s32.totalorder %s24, 0
      %p254 = por %p252, %p253
      %p255 = scmp.ne.s32.totalorder %s247, %s249
      %p256 = scmp.eq.s32.totalorder %s29, 1
      %p257 = por %p255, %p256
      %p258 = scmp.ne.s32.totalorder %s249, %s250
      %p259 = scmp.eq.s32.totalorder %s29, 0
      %p260 = por %p258, %p259
      %p261 = scmp.ne.s32.totalorder %s249, %s250
      %p262 = scmp.eq.s32.totalorder %s30, 1
      %p263 = por %p261, %p262
      %p265 = scmp.ne.s32.totalorder %s250, %s264
      %p266 = scmp.eq.s32.totalorder %s30, 0
      %p267 = por %p265, %p266
      %s269 = sadd.s32 %s268, 1
      %p272 = scmp.eq.s32.totalorder %s24, 1
      %p273 = scmp.ne.s32.totalorder %s268, %s270
      %p274 = scmp.eq.s32.totalorder %s24, 0
      %p275 = por %p273, %p274
      %p276 = scmp.ne.s32.totalorder %s268, %s270
      %p277 = scmp.eq.s32.totalorder %s29, 1
      %p278 = por %p276, %p277
      %p279 = scmp.ne.s32.totalorder %s270, %s271
      %p280 = scmp.eq.s32.totalorder %s29, 0
      %p281 = por %p279, %p280
      %p282 = scmp.ne.s32.totalorder %s270, %s271
      %p283 = scmp.eq.s32.totalorder %s30, 1
      %p284 = por %p282, %p283
      %p286 = scmp.ne.s32.totalorder %s271, %s285
      %p287 = scmp.eq.s32.totalorder %s30, 0
      %p288 = por %p286, %p287
      %s290 = sadd.s32 %s289, 1
      %p293 = scmp.eq.s32.totalorder %s24, 1
      %p294 = scmp.ne.s32.totalorder %s289, %s291
      %p295 = scmp.eq.s32.totalorder %s24, 0
      %p296 = por %p294, %p295
      %p297 = scmp.ne.s32.totalorder %s289, %s291
      %p298 = scmp.eq.s32.totalorder %s29, 1
      %p299 = por %p297, %p298
      %p300 = scmp.ne.s32.totalorder %s291, %s292
      %p301 = scmp.eq.s32.totalorder %s29, 0
      %p302 = por %p300, %p301
      %p303 = scmp.ne.s32.totalorder %s291, %s292
      %p304 = scmp.eq.s32.totalorder %s30, 1
      %p305 = por %p303, %p304
      %p307 = scmp.ne.s32.totalorder %s292, %s306
      %p308 = scmp.eq.s32.totalorder %s30, 0
      %p309 = por %p307, %p308
      %s310 = ssub.s32 %s24, %s31
      %p311 = scmp.eq.s32.totalorder %s310, 0
      %s313 = sadd.s32 %s312, 1
      %s314 = scalar_select %p311, %s312, %s313
      %p317 = pneg %p311
      %p318 = scmp.eq.s32.totalorder %s24, 1
      %p319 = por %p317, %p318
      %p320 = scmp.ne.s32.totalorder %s312, %s315
      %p321 = scmp.eq.s32.totalorder %s24, 0
      %p322 = por %p320, %p321
      %p323 = scmp.ne.s32.totalorder %s312, %s315
      %p324 = scmp.eq.s32.totalorder %s29, 1
      %p325 = por %p323, %p324
      %p326 = scmp.ne.s32.totalorder %s315, %s316
      %p327 = scmp.eq.s32.totalorder %s29, 0
      %p328 = por %p326, %p327
      %p329 = scmp.ne.s32.totalorder %s315, %s316
      %p330 = scmp.eq.s32.totalorder %s30, 1
      %p331 = por %p329, %p330
      %p333 = scmp.ne.s32.totalorder %s316, %s332
      %p334 = scmp.eq.s32.totalorder %s30, 0
      %p335 = por %p333, %p334
      %p336 = scmp.le.s32.totalorder 1, %s24
      %p337 = scmp.lt.s32.totalorder %s24, 3
      %p338 = pnand %p336, %p337
      %p339 = pneg %p338
      // Predicated region
      $region9: #{tpu_custom_call.1} parent=5 // pred_check
        _
      $region10: #{tpu_custom_call.1} parent=5 // pred_check_branch
        %341 = sbr.rel (%p338) target = $region12
      $region11: #{tpu_custom_call.1} parent=5 // pred_region
        %s342 = ssub.s32 %s24, 1
        // Predicated region
        $region13: #{tpu_custom_call.1} parent=11 // pred_check
          %p343 = pneg %p71
        $region14: #{tpu_custom_call.1} parent=11 // pred_check_branch
          %345 = sbr.rel (%p343) target = $region16
        $region15: #{tpu_custom_call.1} parent=11 // pred_region
          _
        $region16: #{tpu_custom_call.1} parent=11 // pred_fallthru
          _
        // Predicated region
        $region17: #{tpu_custom_call.1} parent=11 // pred_check
          %p346 = pneg %p92
        $region18: #{tpu_custom_call.1} parent=11 // pred_check_branch
          %348 = sbr.rel (%p346) target = $region20
        $region19: #{tpu_custom_call.1} parent=11 // pred_region
          _
        $region20: #{tpu_custom_call.1} parent=11 // pred_fallthru
          _
        // Predicated region
        $region21: #{tpu_custom_call.1} parent=11 // pred_check
          %p349 = pneg %p113
        $region22: #{tpu_custom_call.1} parent=11 // pred_check_branch
          %351 = sbr.rel (%p349) target = $region24
        $region23: #{tpu_custom_call.1} parent=11 // pred_region
          %353 = vsyncadd [#allocation3], 0
          %s354 = sshll.u32 %s3, 4
          %s355 = int_to_ptr.hbm [resolvable:$true] %s354
          %s356 = sshll.u32 [#allocation2], 4
          %s357 = int_to_ptr.vmem [resolvable:$true] %s356
          %362 = dma.hbm_to_vmem [thread:$0]  %s355, 256, %s357, [#allocation3], 128, 128, 8
        $region24: #{tpu_custom_call.1} parent=11 // pred_fallthru
          _
        // Predicated region
        $region25: #{tpu_custom_call.1} parent=11 // pred_check
          %p363 = pneg %p134
        $region26: #{tpu_custom_call.1} parent=11 // pred_check_branch
          %365 = sbr.rel (%p363) target = $region28
        $region27: #{tpu_custom_call.1} parent=11 // pred_region
          %367 = vsyncadd [#allocation6], 0
          %s369 = sshll.u32 %s4, 4
          %s370 = int_to_ptr.hbm [resolvable:$true] %s369
          %s371 = sshll.u32 [#allocation5], 4
          %s372 = int_to_ptr.vmem [resolvable:$true] %s371
          %374 = dma.hbm_to_vmem [thread:$0]  %s370, 16, %s372, [#allocation6]
        $region28: #{tpu_custom_call.1} parent=11 // pred_fallthru
          _
        // Predicated region
        $region29: #{tpu_custom_call.1} parent=11 // pred_check
          %p375 = pneg %p155
        $region30: #{tpu_custom_call.1} parent=11 // pred_check_branch
          %377 = sbr.rel (%p375) target = $region32
        $region31: #{tpu_custom_call.1} parent=11 // pred_region
          _
        $region32: #{tpu_custom_call.1} parent=11 // pred_fallthru
          _
        // Predicated region
        $region33: #{tpu_custom_call.1} parent=11 // pred_check
          %p378 = pneg %p176
        $region34: #{tpu_custom_call.1} parent=11 // pred_check_branch
          %380 = sbr.rel (%p378) target = $region36
        $region35: #{tpu_custom_call.1} parent=11 // pred_region
          _
        $region36: #{tpu_custom_call.1} parent=11 // pred_fallthru
          _
        // Predicated region
        $region37: #{tpu_custom_call.1} parent=11 // pred_check
          %p381 = pneg %p197
        $region38: #{tpu_custom_call.1} parent=11 // pred_check_branch
          %383 = sbr.rel (%p381) target = $region40
        $region39: #{tpu_custom_call.1} parent=11 // pred_region
          _
        $region40: #{tpu_custom_call.1} parent=11 // pred_fallthru
          _
        // Predicated region
        $region41: #{tpu_custom_call.1} parent=11 // pred_check
          %p384 = pneg %p218
        $region42: #{tpu_custom_call.1} parent=11 // pred_check_branch
          %386 = sbr.rel (%p384) target = $region44
        $region43: #{tpu_custom_call.1} parent=11 // pred_region
          _
        $region44: #{tpu_custom_call.1} parent=11 // pred_fallthru
          _
        // Predicated region
        $region45: #{tpu_custom_call.1} parent=11 // pred_check
          %p387 = pneg %p239
        $region46: #{tpu_custom_call.1} parent=11 // pred_check_branch
          %389 = sbr.rel (%p387) target = $region48
        $region47: #{tpu_custom_call.1} parent=11 // pred_region
          _
        $region48: #{tpu_custom_call.1} parent=11 // pred_fallthru
          _
        // Predicated region
        $region49: #{tpu_custom_call.1} parent=11 // pred_check
          %p390 = pneg %p260
        $region50: #{tpu_custom_call.1} parent=11 // pred_check_branch
          %392 = sbr.rel (%p390) target = $region52
        $region51: #{tpu_custom_call.1} parent=11 // pred_region
          _
        $region52: #{tpu_custom_call.1} parent=11 // pred_fallthru
          _
        // Predicated region
        $region53: #{tpu_custom_call.1} parent=11 // pred_check
          %p393 = pneg %p281
        $region54: #{tpu_custom_call.1} parent=11 // pred_check_branch
          %395 = sbr.rel (%p393) target = $region56
        $region55: #{tpu_custom_call.1} parent=11 // pred_region
          %397 = vsyncadd [#allocation6], 0
          %s398 = sshll.u32 %s11, 4
          %s399 = int_to_ptr.hbm [resolvable:$true] %s398
          %s400 = sshll.u32 [#allocation7], 4
          %s401 = int_to_ptr.vmem [resolvable:$true] %s400
          %406 = dma.hbm_to_vmem [thread:$0]  %s399, 2048, %s401, [#allocation6], 256, 256, 16
        $region56: #{tpu_custom_call.1} parent=11 // pred_fallthru
          _
        // Predicated region
        $region57: #{tpu_custom_call.1} parent=11 // pred_check
          %p407 = pneg %p302
        $region58: #{tpu_custom_call.1} parent=11 // pred_check_branch
          %409 = sbr.rel (%p407) target = $region60
        $region59: #{tpu_custom_call.1} parent=11 // pred_region
          _
        $region60: #{tpu_custom_call.1} parent=11 // pred_fallthru
          _
      $region12: #{tpu_custom_call.1} parent=5 // pred_fallthru
        _
      %p410 = scmp.lt.s32.totalorder %s24, 2
      // Predicated region
      $region61: #{tpu_custom_call.1} parent=5 // pred_check
        %p411 = pneg %p410
      $region62: #{tpu_custom_call.1} parent=5 // pred_check_branch
        %413 = sbr.rel (%p411) target = $region64
      $region63: #{tpu_custom_call.1} parent=5 // pred_region
        // Predicated region
        $region65: #{tpu_custom_call.1} parent=63 // pred_check
          %p414 = pneg %p44
        $region66: #{tpu_custom_call.1} parent=63 // pred_check_branch
          %416 = sbr.rel (%p414) target = $region68
        $region67: #{tpu_custom_call.1} parent=63 // pred_region
          %p417 = scmp.lt.s32.totalorder %s24, 1
          %s418 = scalar_select %p417, %s24, 1
          %s419 = smul.addr %s418, 8
          %s420 = scalar_lea.vmem %s0, %s419
        $region68: #{tpu_custom_call.1} parent=63 // pred_fallthru
          _
      $region64: #{tpu_custom_call.1} parent=5 // pred_fallthru
        _
      %p421 = scmp.le.s32.totalorder 1, %s24
      %p422 = scmp.lt.s32.totalorder %s24, 3
      %p423 = pnand %p421, %p422
      %p424 = pneg %p423
      // Predicated region
      $region69: #{tpu_custom_call.1} parent=5 // pred_check
        _
      $region70: #{tpu_custom_call.1} parent=5 // pred_check_branch
        %426 = sbr.rel (%p423) target = $region72
      $region71: #{tpu_custom_call.1} parent=5 // pred_region
        %s427 = ssub.s32 %s24, 1
        // Predicated region
        $region73: #{tpu_custom_call.1} parent=71 // pred_check
          %p428 = pneg %p113
        $region74: #{tpu_custom_call.1} parent=71 // pred_check_branch
          %430 = sbr.rel (%p428) target = $region76
        $region75: #{tpu_custom_call.1} parent=71 // pred_region
          %432 = dma.done [#allocation3], 256
        $region76: #{tpu_custom_call.1} parent=71 // pred_fallthru
          _
        // Predicated region
        $region77: #{tpu_custom_call.1} parent=71 // pred_check
          %p433 = pneg %p134
        $region78: #{tpu_custom_call.1} parent=71 // pred_check_branch
          %435 = sbr.rel (%p433) target = $region80
        $region79: #{tpu_custom_call.1} parent=71 // pred_region
          %437 = dma.done [#allocation6], 16
        $region80: #{tpu_custom_call.1} parent=71 // pred_fallthru
          _
        // Predicated region
        $region81: #{tpu_custom_call.1} parent=71 // pred_check
          %p438 = pneg %p281
        $region82: #{tpu_custom_call.1} parent=71 // pred_check_branch
          %440 = sbr.rel (%p438) target = $region84
        $region83: #{tpu_custom_call.1} parent=71 // pred_region
          %442 = dma.done [#allocation6], 2048
        $region84: #{tpu_custom_call.1} parent=71 // pred_fallthru
          _
        %p443 = scmp.lt.s32.totalorder %s29, 1
        %s444 = scalar_select %p443, %s29, 1
        %s445 = smul.addr %s444, 8
        %s446 = scalar_lea.vmem %s0, %s445
        %p447 = pneg %p50
        %p448 = pneg %p47
        %p449 = pneg %p71
        %p450 = pneg %p68
        %p451 = pneg %p92
        %p452 = pneg %p89
        %p453 = pneg %p113
        %p454 = pneg %p110
        %p455 = pneg %p134
        %p456 = pneg %p131
        %p457 = pneg %p155
        %p458 = pneg %p152
        %p459 = pneg %p176
        %p460 = pneg %p173
        %p461 = pneg %p197
        %p462 = pneg %p194
        %p463 = pneg %p218
        %p464 = pneg %p215
        %p465 = pneg %p239
        %p466 = pneg %p236
        %p467 = pneg %p260
        %p468 = pneg %p257
        %p469 = pneg %p281
        %p470 = pneg %p278
        %p471 = pneg %p302
        %p472 = pneg %p299
        %p473 = pneg %p328
        %p474 = pneg %p325
        %s475 = sand.u32 %s315, 1
        %s476 = scalar_lea.sflag [#allocation4], %s475
        %s477 = sand.u32 %s315, 1
        %s478 = smul.addr %s477, 32
        %s479 = scalar_lea.vmem [#allocation8], %s478
        %p480 = scmp.lt.s32.totalorder %s29, 1
        %s481 = scalar_select %p480, %s29, 1
        %s482 = smul.addr %s481, 8
        %s483 = scalar_lea.vmem %s0, %s482
        %v484 = vld [vmem:[%s483] sm:$0xff]
        %v485 = vld [vmem:[%s1] sm:$0xff]
        %v486 = vld [vmem:[%s1 + $0x8] sm:$0xff]
        %v487 = vld [vmem:[%s1 + $0x10] sm:$0xff]
        %v488 = vld [vmem:[%s1 + $0x18] sm:$0xff]
        %v489 = vld [vmem:[%s1 + $0x20] sm:$0xff]
        %v490 = vld [vmem:[%s1 + $0x28] sm:$0xff]
        %v491 = vld [vmem:[%s1 + $0x30] sm:$0xff]
        %v492 = vld [vmem:[%s1 + $0x38] sm:$0xff]
        %v493 = vld [vmem:[%s2] sm:$0x1]
        %v495 = vperm.slane %v493, 0
        %vm497 = vcmask 523264
        %v499 = vsel %vm497, %v484, 0
        %501 = vmatpush.msra.mxu0 0.0
        %502 = vmatpush.msra.mxu0 0.0
        %503 = vmatpush.msra.mxu0 0.0
        %504 = vmatpush.msra.mxu0 0.0
        %505 = vmatpush.msra.mxu0 0.0
        %506 = vmatpush.msra.mxu0 0.0
        %507 = vmatpush.msra.mxu0 0.0
        %508 = vmatpush.msra.mxu0 0.0
        %509 = vmatpush.msra.mxu0 %v492
        %510 = vmatpush.msra.mxu0 %v491
        %511 = vmatpush.msra.mxu0 %v490
        %512 = vmatpush.msra.mxu0 %v489
        %513 = vmatpush.msra.mxu0 %v488
        %514 = vmatpush.msra.mxu0 %v487
        %515 = vmatpush.msra.mxu0 %v486
        %516 = vmatpush.msra.mxu0 %v485
        %517 = vmatmul.f32.gmra.mxu0 %v499
        %v518 = vpop.f32.mrf.mxu0
        %v519 = vadd.f32 %v495, %v518
        %520 = vdwg.mxu0
        %v521 = vtanh.pop %v519
        %v522 = vld [vmem:[#allocation2] sm:$0xff]
        %v523 = vld [vmem:[#allocation2 + $0x8] sm:$0xff]
        %v524 = vld [vmem:[#allocation5] sm:$0x1]
        %v526 = vperm.slane %v524, 0
        %vm528 = vcmask 130048
        %v530 = vsel %vm528, %v521, 0
        %532 = vmatpush.msra.mxu0 0.0
        %533 = vmatpush.msra.mxu0 0.0
        %534 = vmatpush.msra.mxu0 0.0
        %535 = vmatpush.msra.mxu0 0.0
        %536 = vmatpush.msra.mxu0 0.0
        %537 = vmatpush.msra.mxu0 0.0
        %538 = vmatpush.msra.mxu0 0.0
        %539 = vmatpush.msra.mxu0 0.0
        %540 = vmatpush.msra.mxu0 0.0
        %541 = vmatpush.msra.mxu0 0.0
        %542 = vmatpush.msra.mxu0 0.0
        %543 = vmatpush.msra.mxu0 0.0
        %544 = vmatpush.msra.mxu0 0.0
        %545 = vmatpush.msra.mxu0 0.0
        %546 = vmatpush.msra.mxu0 %v523
        %547 = vmatpush.msra.mxu0 %v522
        %548 = vmatmul.f32.gmra.mxu0 %v530
        %v549 = vpop.f32.mrf.mxu0
        %v550 = vadd.f32 %v526, %v549
        %551 = vdwg.mxu0
        %v552 = vtanh.pop %v550
        %v553 = vld [vmem:[%s5] sm:$0xff]
        %v554 = vld [vmem:[%s5 + $0x8] sm:$0xff]
        %v555 = vld [vmem:[%s6] sm:$0x1]
        %v557 = vperm.slane %v555, 0
        %v560 = vsel %vm528, %v552, 0
        %562 = vmatpush.msra.mxu0 0.0
        %563 = vmatpush.msra.mxu0 0.0
        %564 = vmatpush.msra.mxu0 0.0
        %565 = vmatpush.msra.mxu0 0.0
        %566 = vmatpush.msra.mxu0 0.0
        %567 = vmatpush.msra.mxu0 0.0
        %568 = vmatpush.msra.mxu0 0.0
        %569 = vmatpush.msra.mxu0 0.0
        %570 = vmatpush.msra.mxu0 0.0
        %571 = vmatpush.msra.mxu0 0.0
        %572 = vmatpush.msra.mxu0 0.0
        %573 = vmatpush.msra.mxu0 0.0
        %574 = vmatpush.msra.mxu0 0.0
        %575 = vmatpush.msra.mxu0 0.0
        %576 = vmatpush.msra.mxu0 %v554
        %577 = vmatpush.msra.mxu0 %v553
        %578 = vmatmul.f32.gmra.mxu0 %v560
        %v579 = vpop.f32.mrf.mxu0
        %v580 = vadd.f32 %v557, %v579
        %581 = vdwg.mxu0
        %v582 = vld [vmem:[%s7] sm:$0xff]
        %v583 = vld [vmem:[%s8] sm:$0x1]
        %v585 = vperm.slane %v583, 0
        %vm587 = vcmask 64512
        %v589 = vsel %vm587, %v580, 0
        %591 = vmatpush.msra.mxu0 0.0
        %592 = vmatpush.msra.mxu0 0.0
        %593 = vmatpush.msra.mxu0 0.0
        %594 = vmatpush.msra.mxu0 0.0
        %595 = vmatpush.msra.mxu0 0.0
        %596 = vmatpush.msra.mxu0 0.0
        %597 = vmatpush.msra.mxu0 0.0
        %598 = vmatpush.msra.mxu0 0.0
        %599 = vmatpush.msra.mxu0 0.0
        %600 = vmatpush.msra.mxu0 0.0
        %601 = vmatpush.msra.mxu0 0.0
        %602 = vmatpush.msra.mxu0 0.0
        %603 = vmatpush.msra.mxu0 0.0
        %604 = vmatpush.msra.mxu0 0.0
        %605 = vmatpush.msra.mxu0 0.0
        %606 = vmatpush.msra.mxu0 %v582
        %607 = vmatmul.f32.gmra.mxu0 %v589
        %v608 = vpop.f32.mrf.mxu0
        %v609 = vadd.f32 %v585, %v608
        %610 = vdwg.mxu0
        %v611 = vtanh.pop %v609
        %v612 = vld [vmem:[%s9] sm:$0xff]
        %v613 = vld [vmem:[%s9 + $0x8] sm:$0xff]
        %v614 = vld [vmem:[%s9 + $0x10] sm:$0xff]
        %v615 = vld [vmem:[%s9 + $0x18] sm:$0xff]
        %v616 = vld [vmem:[%s9 + $0x20] sm:$0xff]
        %v617 = vld [vmem:[%s9 + $0x28] sm:$0xff]
        %v618 = vld [vmem:[%s9 + $0x30] sm:$0xff]
        %v619 = vld [vmem:[%s9 + $0x38] sm:$0xff]
        %v620 = vld [vmem:[%s10] sm:$0x1]
        %v622 = vperm.slane %v620, 0
        %v625 = vsel %vm497, %v611, 0
        %627 = vmatpush.msra.mxu0 0.0
        %628 = vmatpush.msra.mxu0 0.0
        %629 = vmatpush.msra.mxu0 0.0
        %630 = vmatpush.msra.mxu0 0.0
        %631 = vmatpush.msra.mxu0 0.0
        %632 = vmatpush.msra.mxu0 0.0
        %633 = vmatpush.msra.mxu0 0.0
        %634 = vmatpush.msra.mxu0 0.0
        %635 = vmatpush.msra.mxu0 %v619
        %636 = vmatpush.msra.mxu0 %v618
        %637 = vmatpush.msra.mxu0 %v617
        %638 = vmatpush.msra.mxu0 %v616
        %639 = vmatpush.msra.mxu0 %v615
        %640 = vmatpush.msra.mxu0 %v614
        %641 = vmatpush.msra.mxu0 %v613
        %642 = vmatpush.msra.mxu0 %v612
        %643 = vmatmul.f32.gmra.mxu0 %v625
        %v644 = vpop.f32.mrf.mxu0
        %v645 = vadd.f32 %v622, %v644
        %646 = vdwg.mxu0
        %v647 = vtanh.pop %v645
        %v648 = vld [vmem:[#allocation7] sm:$0xff]
        %v649 = vld [vmem:[#allocation7 + $0x8] sm:$0xff]
        %v650 = vld [vmem:[#allocation7 + $0x10] sm:$0xff]
        %v651 = vld [vmem:[#allocation7 + $0x18] sm:$0xff]
        %v652 = vld [vmem:[#allocation7 + $0x20] sm:$0xff]
        %v653 = vld [vmem:[#allocation7 + $0x28] sm:$0xff]
        %v654 = vld [vmem:[#allocation7 + $0x30] sm:$0xff]
        %v655 = vld [vmem:[#allocation7 + $0x38] sm:$0xff]
        %v656 = vld [vmem:[#allocation7 + $0x40] sm:$0xff]
        %v657 = vld [vmem:[#allocation7 + $0x48] sm:$0xff]
        %v658 = vld [vmem:[#allocation7 + $0x50] sm:$0xff]
        %v659 = vld [vmem:[#allocation7 + $0x58] sm:$0xff]
        %v660 = vld [vmem:[#allocation7 + $0x60] sm:$0xff]
        %v661 = vld [vmem:[#allocation7 + $0x68] sm:$0xff]
        %v662 = vld [vmem:[#allocation7 + $0x70] sm:$0xff]
        %v663 = vld [vmem:[#allocation7 + $0x78] sm:$0xff]
        %v664 = vld [vmem:[%s12] sm:$0x3]
        %v666 = vperm.slane %v664, 0
        %v667 = vperm.slane %v664, 1
        %v671 = vsel %vm497, %v647, 0
        %673 = vmatpush.msra.mxu0 0.0
        %674 = vmatpush.msra.mxu0 0.0
        %675 = vmatpush.msra.mxu0 0.0
        %676 = vmatpush.msra.mxu0 0.0
        %677 = vmatpush.msra.mxu0 0.0
        %678 = vmatpush.msra.mxu0 0.0
        %679 = vmatpush.msra.mxu0 0.0
        %680 = vmatpush.msra.mxu0 0.0
        %681 = vmatpush.msra.mxu0 %v662
        %682 = vmatpush.msra.mxu0 %v660
        %683 = vmatpush.msra.mxu0 %v658
        %684 = vmatpush.msra.mxu0 %v656
        %685 = vmatpush.msra.mxu0 %v654
        %686 = vmatpush.msra.mxu0 %v652
        %687 = vmatpush.msra.mxu0 %v650
        %688 = vmatpush.msra.mxu0 %v648
        %689 = vmatmul.f32.gmra.mxu0 %v671
        %v690 = vpop.f32.mrf.mxu0
        %v691 = vadd.f32 %v666, %v690
        %692 = vdwg.mxu0
        %693 = vmatpush.msra.mxu0 0.0
        %694 = vmatpush.msra.mxu0 0.0
        %695 = vmatpush.msra.mxu0 0.0
        %696 = vmatpush.msra.mxu0 0.0
        %697 = vmatpush.msra.mxu0 0.0
        %698 = vmatpush.msra.mxu0 0.0
        %699 = vmatpush.msra.mxu0 0.0
        %700 = vmatpush.msra.mxu0 0.0
        %701 = vmatpush.msra.mxu0 %v663
        %702 = vmatpush.msra.mxu0 %v661
        %703 = vmatpush.msra.mxu0 %v659
        %704 = vmatpush.msra.mxu0 %v657
        %705 = vmatpush.msra.mxu0 %v655
        %706 = vmatpush.msra.mxu0 %v653
        %707 = vmatpush.msra.mxu0 %v651
        %708 = vmatpush.msra.mxu0 %v649
        %709 = vmatmul.f32.gmra.mxu0 %v671
        %v710 = vpop.f32.mrf.mxu0
        %v711 = vadd.f32 %v667, %v710
        %712 = vdwg.mxu0
        %v713 = vtanh.pop %v691
        %v714 = vtanh.pop %v711
        %715 = vst.msk [vmem:[%s479] sm:$0xff] %vm497, %v713
        %717 = vrot.lane.b32.xlu0 %v713, 64
        %v718 = vpop.permute.xlu0 %717
        %s720 = scalar_lea.vmem %s479, 8 [#allocation8]
        %721 = vst.msk [vmem:[%s720] sm:$0xff] %vm497, %v718
        %s722 = scalar_lea.vmem %s479, 16 [#allocation8]
        %723 = vst.msk [vmem:[%s722] sm:$0xff] %vm497, %v714
        %725 = vrot.lane.b32.xlu0 %v714, 64
        %v726 = vpop.permute.xlu0 %725
        %s728 = scalar_lea.vmem %s479, 24 [#allocation8]
        %729 = vst.msk [vmem:[%s728] sm:$0xff] %vm497, %v726
        %s730 = sand.u32 %s315, 1
        %s731 = scalar_lea.sflag [#allocation4], %s730
        %s732 = sand.u32 %s315, 1
        %s733 = smul.addr %s732, 32
        %s734 = scalar_lea.vmem [#allocation8], %s733
        // Predicated region
        $region85: #{tpu_custom_call.1} parent=71 // pred_check
          %p735 = pneg %p325
        $region86: #{tpu_custom_call.1} parent=71 // pred_check_branch
          %737 = sbr.rel (%p735) target = $region88
        $region87: #{tpu_custom_call.1} parent=71 // pred_region
          %739 = vsyncadd %s731, 0
          %s740 = smul.addr %s29, 8
          %s741 = scalar_lea.hbm %s13, %s740
          %s742 = sshll.u32 %s734, 4
          %s743 = int_to_ptr.vmem [resolvable:$true] %s742
          %s744 = sshll.u32 %s741, 4
          %s745 = int_to_ptr.hbm [resolvable:$true] %s744
          %750 = dma.vmem_to_hbm [thread:$0]  %s743, 512, %s745, %s731, 128, 256, 8
        $region88: #{tpu_custom_call.1} parent=71 // pred_fallthru
          _
      $region72: #{tpu_custom_call.1} parent=5 // pred_fallthru
        _
      %p751 = scmp.le.s32.totalorder 2, %s24
      // Predicated region
      $region89: #{tpu_custom_call.1} parent=5 // pred_check
        %p752 = pneg %p751
      $region90: #{tpu_custom_call.1} parent=5 // pred_check_branch
        %754 = sbr.rel (%p752) target = $region92
      $region91: #{tpu_custom_call.1} parent=5 // pred_region
        %s755 = ssub.s32 %s24, 2
        // Predicated region
        $region93: #{tpu_custom_call.1} parent=91 // pred_check
          %p756 = pneg %p331
        $region94: #{tpu_custom_call.1} parent=91 // pred_check_branch
          %758 = sbr.rel (%p756) target = $region96
        $region95: #{tpu_custom_call.1} parent=91 // pred_region
          %s759 = sand.u32 %s316, 1
          %s760 = scalar_lea.sflag [#allocation4], %s759
          %s761 = sand.u32 %s316, 1
          %s762 = smul.addr %s761, 32
          %s763 = scalar_lea.vmem [#allocation8], %s762
          %765 = dma.done %s760, 512
        $region96: #{tpu_custom_call.1} parent=91 // pred_fallthru
          _
      $region92: #{tpu_custom_call.1} parent=5 // pred_fallthru
        _
    $region6: #{tpu_custom_call.1} parent=1 // loop_footer
      %s28 = sadd.s32 1, %s24
    $region7: #{tpu_custom_call.1} parent=1 // loop_footer_branch
      %23 = sbr.rel target = $region3
    $region8: #{tpu_custom_call.1} parent=1 // loop_exit
      _
    %766 = vsyncpa [#allocation3], 1
    %s767 = scalar_lea.sflag [#allocation3], 1
    %768 = vsyncpa %s767, 1
    %769 = vsyncpa [#allocation6], 1
    %770 = vsyncpa [#allocation4], 1
    %s771 = scalar_lea.sflag [#allocation4], 1
    %772 = vsyncpa %s771, 1

</llo_original>
